<compile_context>
chip_gen: v7x
topology: tpu7x:2x2x1
jax: 0.10.0
libtpu: 0.0.40
codegen_flags: <defaults>
</compile_context>

<pallas_src>
import functools

import jax
import jax.numpy as jnp
from jax.experimental import pallas as pl
from jax.experimental.pallas import tpu as pltpu


def _round_up(x, m):
    return (x + m - 1) // m * m


@functools.lru_cache(maxsize=None)
def _vmem_limit_bytes():
    """Generation-aware scoped-VMEM limit: ~7/8 of physical per-core VMEM
    (v5e/v6e: 128 MiB -> 112 MiB; v7x: 64 MiB -> 56 MiB)."""
    try:
        cap = int(pltpu.get_tpu_info().vmem_capacity_bytes)
    except Exception:  # conservative fallback if the query is unavailable
        cap = 64 * 1024 * 1024
    return max(32 * 1024 * 1024, (cap * 7) // 8)


def _pick_tm(M, Dp, Hp, *, tm_max=512):
    """Largest row tile (multiple of 16, <= tm_max) whose working set fits VMEM.

    No forced grid split: single-TC v5e/v6e always prefer one big tile (avoids
    the ~600-cycle per-step overhead and keeps the MXU M-extent full); on v7x
    the grid only splits across the two TensorCores when M > tile, i.e. when
    per-core matmul work clearly exceeds the duplicated resident-weight DMA.
    """
    budget = int(_vmem_limit_bytes() * 0.75)
    # Single-buffered resident weights + f32 biases.
    w_bytes = 2 * Dp * Hp * 2 + (Hp + Dp) * 4

    def fits(t):
        stream = 2 * t * Dp * 2 + 2 * t * Dp * 2   # double-buffered bf16 x in + bf16 out
        inter = t * Hp * 4 + t * Hp * 2            # f32 GELU intermediate + bf16 copy
        return w_bytes + stream + inter <= budget

    tm = min(_round_up(tm_max, 16), _round_up(max(M, 16), 16))
    while tm > 16 and not fits(tm):
        tm = _round_up(tm // 2, 16)
    return tm


# ----------------------------- Pallas kernel ------------------------------- #
def _mlp_kernel(x_ref, w1_ref, b1_ref, w2_ref, b2_ref, o_ref):
    # x: (tm, Dp) bf16 | w1: (Dp, Hp) bf16 | b1: (1, Hp) f32
    # w2: (Hp, Dp) bf16 | b2: (1, Dp) f32  | o: (tm, Dp) bf16
    h = jnp.dot(x_ref[...], w1_ref[...], preferred_element_type=jnp.float32)
    h = jax.nn.gelu(h + b1_ref[...], approximate=True)   # bias + GELU in f32 (VPU/EUP)
    y = jnp.dot(h.astype(jnp.bfloat16), w2_ref[...],
                preferred_element_type=jnp.float32)
    o_ref[...] = (y + b2_ref[...]).astype(o_ref.dtype)


@jax.jit
def fused_mlp(x, w1p, b1p, w2p, b2p):
    """y = GELU(x @ W1 + b1) @ W2 + b2 for x:(M, D).

    Weights arrive pre-padded / pre-cast (bf16 matrices, f32 biases) so no
    per-call weight re-materialization happens in HBM.  bf16 MXU operands,
    f32 accumulation, bf16 output.  Zero padding is exact: padded H columns see
    zero weights/bias -> GELU(0)=0 -> contribute nothing; padded D output
    columns / padded rows are sliced off below.
    """
    M, D = x.shape
    Dp, Hp = w1p.shape

    tm = _pick_tm(M, Dp, Hp)
    Mp = _round_up(_round_up(max(M, 16), 16), tm)
    grid = (Mp // tm,)

    xb = jnp.pad(x, ((0, Mp - M), (0, Dp - D))).astype(jnp.bfloat16)

    resident = dict(pipeline_mode=pl.Buffered(1))   # constant index map -> 1 buffer

    y = pl.pallas_call(
        _mlp_kernel,
        out_shape=jax.ShapeDtypeStruct((Mp, Dp), jnp.bfloat16),
        grid_spec=pltpu.PrefetchScalarGridSpec(
            num_scalar_prefetch=0,
            grid=grid,
            in_specs=[
                pl.BlockSpec((tm, Dp), lambda i: (i, 0)),               # x rows (pipelined)
                pl.BlockSpec((Dp, Hp), lambda i: (0, 0), **resident),   # W1 (resident)
                pl.BlockSpec((1, Hp), lambda i: (0, 0), **resident),    # b1 (f32, resident)
                pl.BlockSpec((Hp, Dp), lambda i: (0, 0), **resident),   # W2 (resident)
                pl.BlockSpec((1, Dp), lambda i: (0, 0), **resident),    # b2 (f32, resident)
            ],
            out_specs=pl.BlockSpec((tm, Dp), lambda i: (i, 0)),
        ),
        compiler_params=pltpu.CompilerParams(
            dimension_semantics=("parallel",),
            vmem_limit_bytes=_vmem_limit_bytes()),
    )(xb, w1p, b1p, w2p, b2p)
    return y[:M, :D]


# --------------------------- synthetic backbone ----------------------------- #
def init_backbone_params(key, *, num_tokens, dim, hidden, num_masks):
    ks = jax.random.split(key, 6)
    return {
        "w1": jax.random.normal(ks[0], (dim, hidden), jnp.float32) / jnp.sqrt(dim),
        "b1": 0.01 * jax.random.normal(ks[1], (1, hidden), jnp.float32),
        "w2": jax.random.normal(ks[2], (hidden, dim), jnp.float32) / jnp.sqrt(hidden),
        "b2": 0.01 * jax.random.normal(ks[3], (1, dim), jnp.float32),
        "mask_tokens": 0.02 * jax.random.normal(ks[4], (num_masks, dim), jnp.float32),
        "pos_embed": 0.02 * jax.random.normal(ks[5], (num_tokens, dim), jnp.float32),
    }


def prepare_backbone_params(params):
    """One-time lane-dense padding (multiples of 128) + bf16 cast of the MLP
    weights, hoisted out of the per-call path so the kernel's one-time resident
    DMA is the only weight traffic at call time."""
    D, H = params["w1"].shape
    Dp, Hp = _round_up(D, 128), _round_up(H, 128)
    prepped = dict(params)
    prepped.update(
        w1p=jnp.pad(params["w1"], ((0, Dp - D), (0, Hp - H))).astype(jnp.bfloat16),
        b1p=jnp.pad(params["b1"], ((0, 0), (0, Hp - H))).astype(jnp.float32),
        w2p=jnp.pad(params["w2"], ((0, Hp - H), (0, Dp - D))).astype(jnp.bfloat16),
        b2p=jnp.pad(params["b2"], ((0, 0), (0, Dp - D))).astype(jnp.float32),
    )
    return prepped


def _build_queries(params, zi, hi, mc, mt, at, *, mask_index):
    """Per-mask glue (gathers / broadcasts) of the synthetic backbone, plain JAX.

    zi: (B, N, D) context tokens     hi: (B, N, D) targets (unused in forward)
    mc: (B, Kc) int32 ctxt indices   mt: (B, Kt) int32 target indices
    at: (B, 1, D) action cls token   -> returns (B, Kt, D) target queries
    """
    del hi  # loss-time target; not used by the forward pass (matches reference)
    zc = jnp.take_along_axis(zi, mc[:, :, None].astype(jnp.int32), axis=1)   # (B,Kc,D)
    ctx = jnp.mean(zc, axis=1, keepdims=True)                                # (B,1,D)
    pos_t = jnp.take(params["pos_embed"], mt.astype(jnp.int32), axis=0)      # (B,Kt,D)
    q = params["mask_tokens"][mask_index][None, None, :] + pos_t + at + ctx  # (B,Kt,D)
    return q


# ----------------------- PredictorMultiMaskWrapper -------------------------- #
def predictor_multimask_wrapper(params, ctxt, tgt, masks_ctxt, masks_tgt,
                                action_cls_tokens):
    """Faithful port of PredictorMultiMaskWrapper.forward: list normalization +
    per-mask backbone evaluation (mask_index=i), returning a list of outputs.
    The per-mask token-wise MLPs are fused into a single Pallas call so launch
    overhead and the resident-weight DMA are amortized across all mask sets."""
    if not isinstance(ctxt, list):
        ctxt = [ctxt]
    if not isinstance(tgt, list):
        tgt = [tgt]
    if not isinstance(masks_ctxt, list):
        masks_ctxt = [masks_ctxt]
    if not isinstance(masks_tgt, list):
        masks_tgt = [masks_tgt]

    # Per-mask glue (cheap gathers) — mirrors the wrapper's enumerate loop.
    q_rows, shapes = [], []
    for i, (zi, hi, mc, mt, at) in enumerate(
            zip(ctxt, tgt, masks_ctxt, masks_tgt, action_cls_tokens)):
        q = _build_queries(params, zi, hi, mc, mt, at, mask_index=i)
        shapes.append(q.shape)
        q_rows.append(q.reshape(-1, q.shape[-1]))

    # One fused Pallas MLP over every mask's target-query rows.
    y = fused_mlp(jnp.concatenate(q_rows, axis=0),
                  params["w1p"], params["b1p"], params["w2p"], params["b2p"])

    # Split back into the per-mask output list the wrapper must return.
    outs, off = [], 0
    for (B, Kt, D) in shapes:
        outs.append(y[off:off + B * Kt].reshape(B, Kt, D))
        off += B * Kt
    return outs


# ---------------------------------- main ------------------------------------ #
if __name__ == "__main__":
    B, N, D, H = 2, 32, 128, 256    # batch, tokens, model dim (lane-dense), hidden
    Kc, Kt = 12, 8                  # context / target tokens per mask
    num_masks = 2                   # fused MLP rows M = num_masks*B*Kt = 32

    key = jax.random.PRNGKey(0)
    k_params, k_data = jax.random.split(key)
    raw = init_backbone_params(
        k_params, num_tokens=N, dim=D, hidden=H, num_masks=num_masks)
    params = prepare_backbone_params(raw)

    kd = jax.random.split(k_data, 4 * num_masks)
    ctxt_list, tgt_list, mc_list, mt_list, at_list = [], [], [], [], []
    for m in range(num_masks):
        ctxt_list.append(jax.random.normal(kd[4 * m + 0], (B, N, D), jnp.float32))
        tgt_list.append(jax.random.normal(kd[4 * m + 1], (B, N, D), jnp.float32))
        mc_list.append(jax.random.randint(kd[4 * m + 2], (B, Kc), 0, N, jnp.int32))
        mt_list.append(jax.random.randint(kd[4 * m + 3], (B, Kt), 0, N, jnp.int32))
        at_list.append(jnp.full((B, 1, D), 0.1 * (m + 1), jnp.float32))

    outs = predictor_multimask_wrapper(
        params, ctxt_list, tgt_list, mc_list, mt_list, at_list)
    outs = jax.block_until_ready(outs)

    # Pure-JAX reference (same bf16 MXU operands / f32 accumulation as the kernel).
    def ref_backbone(zi, mc, mt, at, i):
        zc = jnp.take_along_axis(zi, mc[:, :, None], axis=1)
        ctx = jnp.mean(zc, axis=1, keepdims=True)
        pos_t = jnp.take(raw["pos_embed"], mt, axis=0)
        q = raw["mask_tokens"][i][None, None, :] + pos_t + at + ctx
        h = jnp.dot(q.astype(jnp.bfloat16), raw["w1"].astype(jnp.bfloat16),
                    preferred_element_type=jnp.float32) + raw["b1"]
        h = jax.nn.gelu(h, approximate=True)
        y = jnp.dot(h.astype(jnp.bfloat16), raw["w2"].astype(jnp.bfloat16),
                    preferred_element_type=jnp.float32) + raw["b2"]
        return y

    assert len(outs) == num_masks
    for i in range(num_masks):
        ref = ref_backbone(ctxt_list[i], mc_list[i], mt_list[i], at_list[i], i)
        assert outs[i].shape == (B, Kt, D)
        assert outs[i].dtype == jnp.bfloat16        # bf16 writeback (f32 accumulation)
        out_f32 = outs[i].astype(jnp.float32)
        err = float(jnp.max(jnp.abs(out_f32 - ref)))
        assert jnp.allclose(out_f32, ref, atol=1e-2, rtol=1e-2), f"max abs err {err}"

    print("KERNEL_OK")
</pallas_src>

<mosaic_0001>
module attributes {stable_mosaic.version = 11 : i64} {
  func.func @_mlp_kernel(%arg0: i32, %arg1: memref<32x128xbf16, #tpu.memory_space<vmem>>, %arg2: memref<128x256xbf16, #tpu.memory_space<vmem>>, %arg3: memref<1x256xf32, #tpu.memory_space<vmem>>, %arg4: memref<256x128xbf16, #tpu.memory_space<vmem>>, %arg5: memref<1x128xf32, #tpu.memory_space<vmem>>, %arg6: memref<32x128xbf16, #tpu.memory_space<vmem>>) attributes {dimension_semantics = [#tpu.dimension_semantics<parallel>], iteration_bounds = array<i64: 1>, scalar_prefetch = 0 : i64, scratch_operands = 0 : i64, tpu.core_type = #tpu.core_type<tc>, window_params = [{transform_indices = @transform_0, window_bounds = array<i64: 32, 128>}, {pipeline_mode = #tpu.pipeline_mode<synchronous>, transform_indices = @transform_1, window_bounds = array<i64: 128, 256>}, {pipeline_mode = #tpu.pipeline_mode<synchronous>, transform_indices = @transform_2, window_bounds = array<i64: 1, 256>}, {pipeline_mode = #tpu.pipeline_mode<synchronous>, transform_indices = @transform_3, window_bounds = array<i64: 256, 128>}, {pipeline_mode = #tpu.pipeline_mode<synchronous>, transform_indices = @transform_4, window_bounds = array<i64: 1, 128>}, {transform_indices = @transform_5, window_bounds = array<i64: 32, 128>}]} {
    %c0 = arith.constant 0 : index
    %c0_0 = arith.constant 0 : index
    %0 = vector.load %arg1[%c0, %c0_0] : memref<32x128xbf16, #tpu.memory_space<vmem>>, vector<32x128xbf16>
    %c0_1 = arith.constant 0 : index
    %c0_2 = arith.constant 0 : index
    %1 = vector.load %arg2[%c0_1, %c0_2] : memref<128x256xbf16, #tpu.memory_space<vmem>>, vector<128x256xbf16>
    %cst = arith.constant dense<0.000000e+00> : vector<32x256xf32>
    %2 = tpu.matmul %0, %1, %cst {dimension_numbers = #tpu.dot_dimension_numbers<[1], [0], [0], [1], [0, 0, 1, 1], [], []>} : vector<32x128xbf16>, vector<128x256xbf16>, vector<32x256xf32> -> vector<32x256xf32>
    %c0_3 = arith.constant 0 : index
    %c0_4 = arith.constant 0 : index
    %3 = vector.load %arg3[%c0_3, %c0_4] : memref<1x256xf32, #tpu.memory_space<vmem>>, vector<1x256xf32>
    %4 = vector.broadcast %3 : vector<1x256xf32> to vector<32x256xf32>
    %5 = arith.addf %2, %4 : vector<32x256xf32>
    %6 = arith.mulf %5, %5 : vector<32x256xf32>
    %7 = arith.mulf %5, %6 : vector<32x256xf32>
    %cst_5 = arith.constant 4.471500e-02 : f32
    %8 = vector.broadcast %cst_5 : f32 to vector<32x256xf32>
    %9 = arith.mulf %8, %7 : vector<32x256xf32>
    %10 = arith.addf %5, %9 : vector<32x256xf32>
    %cst_6 = arith.constant 0.797884583 : f32
    %11 = vector.broadcast %cst_6 : f32 to vector<32x256xf32>
    %12 = arith.mulf %11, %10 : vector<32x256xf32>
    %13 = math.tanh %12 : vector<32x256xf32>
    %cst_7 = arith.constant 1.000000e+00 : f32
    %14 = vector.broadcast %cst_7 : f32 to vector<32x256xf32>
    %15 = arith.addf %14, %13 : vector<32x256xf32>
    %cst_8 = arith.constant 5.000000e-01 : f32
    %16 = vector.broadcast %cst_8 : f32 to vector<32x256xf32>
    %17 = arith.mulf %16, %15 : vector<32x256xf32>
    %18 = arith.mulf %5, %17 : vector<32x256xf32>
    %19 = arith.truncf %18 : vector<32x256xf32> to vector<32x256xbf16>
    %c0_9 = arith.constant 0 : index
    %c0_10 = arith.constant 0 : index
    %20 = vector.load %arg4[%c0_9, %c0_10] : memref<256x128xbf16, #tpu.memory_space<vmem>>, vector<256x128xbf16>
    %cst_11 = arith.constant dense<0.000000e+00> : vector<32x128xf32>
    %21 = tpu.matmul %19, %20, %cst_11 {dimension_numbers = #tpu.dot_dimension_numbers<[1], [0], [0], [1], [0, 0, 1, 1], [], []>} : vector<32x256xbf16>, vector<256x128xbf16>, vector<32x128xf32> -> vector<32x128xf32>
    %c0_12 = arith.constant 0 : index
    %c0_13 = arith.constant 0 : index
    %22 = vector.load %arg5[%c0_12, %c0_13] : memref<1x128xf32, #tpu.memory_space<vmem>>, vector<1x128xf32>
    %23 = vector.broadcast %22 : vector<1x128xf32> to vector<32x128xf32>
    %24 = arith.addf %21, %23 : vector<32x128xf32>
    %25 = arith.truncf %24 : vector<32x128xf32> to vector<32x128xbf16>
    %c0_14 = arith.constant 0 : index
    %c0_15 = arith.constant 0 : index
    %26 = vector.load %arg6[%c0_14, %c0_15] : memref<32x128xbf16, #tpu.memory_space<vmem>>, vector<32x128xbf16>
    tpu.vector_store %arg6[%c0_14, %c0_15], %25 {strides = array<i32>} : memref<32x128xbf16, #tpu.memory_space<vmem>>, vector<32x128xbf16>,
    return
  }
  func.func @transform_0(%arg0: i32) -> (i32, i32) {
    %c0_i32 = arith.constant 0 : i32
    %c0_i32_0 = arith.constant 0 : i32
    return %arg0, %c0_i32 : i32, i32
  }
  func.func @transform_1(%arg0: i32) -> (i32, i32) {
    %c0_i32 = arith.constant 0 : i32
    %c0_i32_0 = arith.constant 0 : i32
    %c0_i32_1 = arith.constant 0 : i32
    return %c0_i32, %c0_i32_0 : i32, i32
  }
  func.func @transform_2(%arg0: i32) -> (i32, i32) {
    %c0_i32 = arith.constant 0 : i32
    %c0_i32_0 = arith.constant 0 : i32
    %c0_i32_1 = arith.constant 0 : i32
    return %c0_i32, %c0_i32_0 : i32, i32
  }
  func.func @transform_3(%arg0: i32) -> (i32, i32) {
    %c0_i32 = arith.constant 0 : i32
    %c0_i32_0 = arith.constant 0 : i32
    %c0_i32_1 = arith.constant 0 : i32
    return %c0_i32, %c0_i32_0 : i32, i32
  }
  func.func @transform_4(%arg0: i32) -> (i32, i32) {
    %c0_i32 = arith.constant 0 : i32
    %c0_i32_0 = arith.constant 0 : i32
    %c0_i32_1 = arith.constant 0 : i32
    return %c0_i32, %c0_i32_0 : i32, i32
  }
  func.func @transform_5(%arg0: i32) -> (i32, i32) {
    %c0_i32 = arith.constant 0 : i32
    %c0_i32_0 = arith.constant 0 : i32
    return %arg0, %c0_i32 : i32, i32
  }
}

</mosaic_0001>

<llo_original>
// kernel: fused_mlp.1
$region0: #{fused_mlp.1}
  #allocation0 [shape = 'u32[]', space=smem, size = 0x4, offset = 0x4, fixed_abs, tag = 'smem constant byte address 0x4 - core index']
  #allocation1 [shape = 'u32[144,128]{1,0:T(1,128)}', space=vmem, size = 0x12000, scoped, tag = 'internal scratch']
  %s0 = inlined_call_operand.vmem [shape: bf16[32,128], index: 0, kind: input, shape index: {}]
  %s1 = inlined_call_operand.hbm [shape: bf16[128,256], index: 1, kind: input, shape index: {}]
  %s2 = inlined_call_operand.vmem [shape: f32[1,256], index: 2, kind: input, shape index: {}]
  %s3 = inlined_call_operand.hbm [shape: bf16[256,128], index: 3, kind: input, shape index: {}]
  %s4 = inlined_call_operand.vmem [shape: f32[1,128], index: 4, kind: input, shape index: {}]
  %s5 = inlined_call_operand.hbm [shape: bf16[32,128], index: 5, kind: output, shape index: {}]
  %s6 = sld [smem:[#allocation0]]
  $region38: #{fused_mlp.1} parent=0
    _
  %s8 = ssub.s32 1, %s6
  %s9 = scalar_select 0, %s8, %s6
  $region1: #{fused_mlp.1} parent=0
    #allocation2 [shape = 'u8[65536]{0}', space=vmem, size = 0x10000, scoped, tag = 'input window, operand 1, single buffered']
    #allocation3 [shape = 's32[1]{0}', space=sflag, size = 0x4, scoped, tag = 'scoped memory for fused_mlp.1']
    #allocation4 [shape = 's32[1]{0}', space=sflag, size = 0x4, scoped, tag = 'scoped memory for fused_mlp.1']
    #allocation5 [shape = 'u8[65536]{0}', space=vmem, size = 0x10000, scoped, tag = 'input window, operand 3, single buffered']
    #allocation6 [shape = 's32[1]{0}', space=sflag, size = 0x4, scoped, tag = 'scoped memory for fused_mlp.1']
    #allocation7 [shape = 'u8[8192]{0}', space=vmem, size = 0x2000, scoped, tag = 'output window, operand 0, single buffered']
    %10 = vsyncpa [#allocation3], 0
    %11 = vsyncpa [#allocation6], 0
    %12 = vsyncpa [#allocation4], 0
    // Predicated region
    $region2: #{fused_mlp.1} parent=1 // pred_check
      _
    $region3: #{fused_mlp.1} parent=1 // pred_check_branch
      %14 = sbr.rel (0) target = $region5
    $region4: #{fused_mlp.1} parent=1 // pred_region
      _
    $region5: #{fused_mlp.1} parent=1 // pred_fallthru
      _
    // Predicated region
    $region6: #{fused_mlp.1} parent=1 // pred_check
      _
    $region7: #{fused_mlp.1} parent=1 // pred_check_branch
      %16 = sbr.rel (0) target = $region9
    $region8: #{fused_mlp.1} parent=1 // pred_region
      %s18 = ssub.s32 2048, 2048
      %19 = vsyncadd [#allocation3], %s18
      %s20 = sshll.u32 [#allocation2], 4
      %s21 = int_to_ptr.vmem [resolvable:$true] %s20
      %26 = dma.hbm_to_vmem [thread:$0]  %s1, 2048, %s21, [#allocation3], 128, 128, 8
    $region9: #{fused_mlp.1} parent=1 // pred_fallthru
      _
    // Predicated region
    $region10: #{fused_mlp.1} parent=1 // pred_check
      _
    $region11: #{fused_mlp.1} parent=1 // pred_check_branch
      %28 = sbr.rel (0) target = $region13
    $region12: #{fused_mlp.1} parent=1 // pred_region
      _
    $region13: #{fused_mlp.1} parent=1 // pred_fallthru
      _
    // Predicated region
    $region14: #{fused_mlp.1} parent=1 // pred_check
      _
    $region15: #{fused_mlp.1} parent=1 // pred_check_branch
      %30 = sbr.rel (0) target = $region17
    $region16: #{fused_mlp.1} parent=1 // pred_region
      %s32 = ssub.s32 2048, 2048
      %33 = vsyncadd [#allocation6], %s32
      %s34 = sshll.u32 [#allocation5], 4
      %s35 = int_to_ptr.vmem [resolvable:$true] %s34
      %40 = dma.hbm_to_vmem [thread:$0]  %s3, 2048, %s35, [#allocation6], 64, 64, 4
    $region17: #{fused_mlp.1} parent=1 // pred_fallthru
      _
    // Predicated region
    $region18: #{fused_mlp.1} parent=1 // pred_check
      _
    $region19: #{fused_mlp.1} parent=1 // pred_check_branch
      %42 = sbr.rel (0) target = $region21
    $region20: #{fused_mlp.1} parent=1 // pred_region
      _
    $region21: #{fused_mlp.1} parent=1 // pred_fallthru
      _
    // Predicated region
    $region22: #{fused_mlp.1} parent=1 // pred_check
      _
    $region23: #{fused_mlp.1} parent=1 // pred_check_branch
      %44 = sbr.rel (0) target = $region25
    $region24: #{fused_mlp.1} parent=1 // pred_region
      %45 = dma.done [#allocation3], 2048
    $region25: #{fused_mlp.1} parent=1 // pred_fallthru
      _
    // Predicated region
    $region26: #{fused_mlp.1} parent=1 // pred_check
      _
    $region27: #{fused_mlp.1} parent=1 // pred_check_branch
      %47 = sbr.rel (0) target = $region29
    $region28: #{fused_mlp.1} parent=1 // pred_region
      %48 = dma.done [#allocation6], 2048
    $region29: #{fused_mlp.1} parent=1 // pred_fallthru
      _
    %v50 = vld [vmem:[%s0] sm:$0xf]
    %v51 = vld [vmem:[%s0 + $0x4] sm:$0xf]
    %v52 = vld [vmem:[%s0 + $0x8] sm:$0xf]
    %v53 = vld [vmem:[%s0 + $0xc] sm:$0xf]
    %v54 = vld [vmem:[#allocation2] sm:$0xff]
    %v55 = vld [vmem:[#allocation2 + $0x8] sm:$0xff]
    %v56 = vld [vmem:[#allocation2 + $0x10] sm:$0xff]
    %v57 = vld [vmem:[#allocation2 + $0x18] sm:$0xff]
    %v58 = vld [vmem:[#allocation2 + $0x20] sm:$0xff]
    %v59 = vld [vmem:[#allocation2 + $0x28] sm:$0xff]
    %v60 = vld [vmem:[#allocation2 + $0x30] sm:$0xff]
    %v61 = vld [vmem:[#allocation2 + $0x38] sm:$0xff]
    %v62 = vld [vmem:[#allocation2 + $0x40] sm:$0xff]
    %v63 = vld [vmem:[#allocation2 + $0x48] sm:$0xff]
    %v64 = vld [vmem:[#allocation2 + $0x50] sm:$0xff]
    %v65 = vld [vmem:[#allocation2 + $0x58] sm:$0xff]
    %v66 = vld [vmem:[#allocation2 + $0x60] sm:$0xff]
    %v67 = vld [vmem:[#allocation2 + $0x68] sm:$0xff]
    %v68 = vld [vmem:[#allocation2 + $0x70] sm:$0xff]
    %v69 = vld [vmem:[#allocation2 + $0x78] sm:$0xff]
    %v70 = vld [vmem:[%s2] sm:$0x3]
    %v72 = vlaneseq
    %v73 = vshrl.u32 %v72, 7
    %v74 = vsub.s32 0, %v73
    %v75 = vrot.slane %v70, %v74
    %v76 = vlaneseq
    %v77 = vshrl.u32 %v76, 7
    %v78 = vsub.s32 1, %v77
    %v79 = vrot.slane %v70, %v78
    %v86 = vunpack.c.l.b16 %v50
    %v87 = vunpack.c.l.b16 %v51
    %v88 = vunpack.c.l.b16 %v52
    %v89 = vunpack.c.l.b16 %v53
    %v90 = vpack.c.b16 %v87, %v86
    %v91 = vpack.c.b16 %v89, %v88
    %v110 = vunpack.c.l.b16 %v54
    %v111 = vunpack.c.h.b16 %v54
    %v112 = vunpack.c.l.b16 %v55
    %v113 = vunpack.c.h.b16 %v55
    %v114 = vunpack.c.l.b16 %v56
    %v115 = vunpack.c.h.b16 %v56
    %v116 = vunpack.c.l.b16 %v57
    %v117 = vunpack.c.h.b16 %v57
    %v118 = vunpack.c.l.b16 %v58
    %v119 = vunpack.c.h.b16 %v58
    %v120 = vunpack.c.l.b16 %v59
    %v121 = vunpack.c.h.b16 %v59
    %v122 = vunpack.c.l.b16 %v60
    %v123 = vunpack.c.h.b16 %v60
    %v124 = vunpack.c.l.b16 %v61
    %v125 = vunpack.c.h.b16 %v61
    %v126 = vunpack.c.l.b16 %v62
    %v127 = vunpack.c.h.b16 %v62
    %v128 = vunpack.c.l.b16 %v63
    %v129 = vunpack.c.h.b16 %v63
    %v130 = vunpack.c.l.b16 %v64
    %v131 = vunpack.c.h.b16 %v64
    %v132 = vunpack.c.l.b16 %v65
    %v133 = vunpack.c.h.b16 %v65
    %v134 = vunpack.c.l.b16 %v66
    %v135 = vunpack.c.h.b16 %v66
    %v136 = vunpack.c.l.b16 %v67
    %v137 = vunpack.c.h.b16 %v67
    %v138 = vunpack.c.l.b16 %v68
    %v139 = vunpack.c.h.b16 %v68
    %v140 = vunpack.c.l.b16 %v69
    %v141 = vunpack.c.h.b16 %v69
    %v142 = vpack.c.b16 %v112, %v110
    %v143 = vpack.c.b16 %v113, %v111
    %v144 = vpack.c.b16 %v116, %v114
    %v145 = vpack.c.b16 %v117, %v115
    %v146 = vpack.c.b16 %v120, %v118
    %v147 = vpack.c.b16 %v121, %v119
    %v148 = vpack.c.b16 %v124, %v122
    %v149 = vpack.c.b16 %v125, %v123
    %v150 = vpack.c.b16 %v128, %v126
    %v151 = vpack.c.b16 %v129, %v127
    %v152 = vpack.c.b16 %v132, %v130
    %v153 = vpack.c.b16 %v133, %v131
    %v154 = vpack.c.b16 %v136, %v134
    %v155 = vpack.c.b16 %v137, %v135
    %v156 = vpack.c.b16 %v140, %v138
    %v157 = vpack.c.b16 %v141, %v139
    %174 = vmatprep.subr.bf16.mxu0 %v143
    %175 = vmatpush1.bf16.msra.mxu0 %v142
    %176 = vmatprep.subr.bf16.mxu0 %v145
    %177 = vmatpush1.bf16.msra.mxu0 %v144
    %178 = vmatprep.subr.bf16.mxu0 %v147
    %179 = vmatpush1.bf16.msra.mxu0 %v146
    %180 = vmatprep.subr.bf16.mxu0 %v149
    %181 = vmatpush1.bf16.msra.mxu0 %v148
    %182 = vmatprep.subr.bf16.mxu0 %v151
    %183 = vmatpush1.bf16.msra.mxu0 %v150
    %184 = vmatprep.subr.bf16.mxu0 %v153
    %185 = vmatpush1.bf16.msra.mxu0 %v152
    %186 = vmatprep.subr.bf16.mxu0 %v155
    %187 = vmatpush1.bf16.msra.mxu0 %v154
    %188 = vmatprep.subr.bf16.mxu0 %v157
    %189 = vmatpush1.bf16.msra.mxu0 %v156
    %190 = vmatprep.subr.bf16.mxu0 0
    %191 = vmatpush1.bf16.msra.mxu0 0
    %192 = vmatprep.subr.bf16.mxu0 0
    %193 = vmatpush1.bf16.msra.mxu0 0
    %194 = vmatprep.subr.bf16.mxu0 0
    %195 = vmatpush1.bf16.msra.mxu0 0
    %196 = vmatprep.subr.bf16.mxu0 0
    %197 = vmatpush1.bf16.msra.mxu0 0
    %198 = vmatprep.subr.bf16.mxu0 0
    %199 = vmatpush1.bf16.msra.mxu0 0
    %200 = vmatprep.subr.bf16.mxu0 0
    %201 = vmatpush1.bf16.msra.mxu0 0
    %202 = vmatprep.subr.bf16.mxu0 0
    %203 = vmatpush1.bf16.msra.mxu0 0
    %204 = vmatprep.subr.bf16.mxu0 0
    %205 = vmatpush1.bf16.msra.mxu0 0
    %206 = vmatprep.mubr.bf16.mxu0 0
    %207 = vmatmul.mubr.bf16.gmra.mrb[0].mxu0 %v90
    %v208 = vpop.f32.mrb[0].mxu0
    %v209 = vadd.f32 %v75, %v208
    %v210 = vpop.f32.mrb[0].mxu0
    %v211 = vadd.f32 %v79, %v210
    %v212 = vpop.f32.mrb[0].mxu0
    %v213 = vadd.f32 %v75, %v212
    %v214 = vpop.f32.mrb[0].mxu0
    %v215 = vadd.f32 %v79, %v214
    %216 = vmatprep.mubr.bf16.mxu0 0
    %217 = vmatmul.mubr.bf16.gmra.mrb[0].mxu0 %v91
    %v218 = vpop.f32.mrb[0].mxu0
    %v219 = vadd.f32 %v75, %v218
    %v220 = vpop.f32.mrb[0].mxu0
    %v221 = vadd.f32 %v79, %v220
    %v222 = vpop.f32.mrb[0].mxu0
    %v223 = vadd.f32 %v75, %v222
    %v224 = vpop.f32.mrb[0].mxu0
    %v225 = vadd.f32 %v79, %v224
    %226 = vdwg.mxu0
    %v227 = vmul.f32 %v209, %v209
    %v228 = vmul.f32 %v211, %v211
    %v229 = vmul.f32 %v213, %v213
    %v230 = vmul.f32 %v215, %v215
    %v231 = vmul.f32 %v219, %v219
    %v232 = vmul.f32 %v221, %v221
    %v233 = vmul.f32 %v223, %v223
    %v234 = vmul.f32 %v225, %v225
    %v235 = vmul.f32 %v209, %v227
    %v236 = vmul.f32 %v211, %v228
    %v237 = vmul.f32 %v213, %v229
    %v238 = vmul.f32 %v215, %v230
    %v239 = vmul.f32 %v219, %v231
    %v240 = vmul.f32 %v221, %v232
    %v241 = vmul.f32 %v223, %v233
    %v242 = vmul.f32 %v225, %v234
    %v243 = vmul.f32 %v235, 0.044715
    %v244 = vmul.f32 %v236, 0.044715
    %v245 = vmul.f32 %v237, 0.044715
    %v246 = vmul.f32 %v238, 0.044715
    %v247 = vmul.f32 %v239, 0.044715
    %v248 = vmul.f32 %v240, 0.044715
    %v249 = vmul.f32 %v241, 0.044715
    %v250 = vmul.f32 %v242, 0.044715
    %v251 = vadd.f32 %v209, %v243
    %v252 = vadd.f32 %v211, %v244
    %v253 = vadd.f32 %v213, %v245
    %v254 = vadd.f32 %v215, %v246
    %v255 = vadd.f32 %v219, %v247
    %v256 = vadd.f32 %v221, %v248
    %v257 = vadd.f32 %v223, %v249
    %v258 = vadd.f32 %v225, %v250
    %v259 = vmul.f32 %v251, 0.7978846
    %v260 = vmul.f32 %v252, 0.7978846
    %v261 = vmul.f32 %v253, 0.7978846
    %v262 = vmul.f32 %v254, 0.7978846
    %v263 = vmul.f32 %v255, 0.7978846
    %v264 = vmul.f32 %v256, 0.7978846
    %v265 = vmul.f32 %v257, 0.7978846
    %v266 = vmul.f32 %v258, 0.7978846
    %v267 = vtanh.pop %v259
    %v268 = vtanh.pop %v260
    %v269 = vtanh.pop %v261
    %v270 = vtanh.pop %v262
    %v271 = vtanh.pop %v263
    %v272 = vtanh.pop %v264
    %v273 = vtanh.pop %v265
    %v274 = vtanh.pop %v266
    %v275 = vadd.f32 %v267, 1.0
    %v276 = vadd.f32 %v268, 1.0
    %v277 = vadd.f32 %v269, 1.0
    %v278 = vadd.f32 %v270, 1.0
    %v279 = vadd.f32 %v271, 1.0
    %v280 = vadd.f32 %v272, 1.0
    %v281 = vadd.f32 %v273, 1.0
    %v282 = vadd.f32 %v274, 1.0
    %v283 = vmul.f32 %v275, 0.5
    %v284 = vmul.f32 %v276, 0.5
    %v285 = vmul.f32 %v277, 0.5
    %v286 = vmul.f32 %v278, 0.5
    %v287 = vmul.f32 %v279, 0.5
    %v288 = vmul.f32 %v280, 0.5
    %v289 = vmul.f32 %v281, 0.5
    %v290 = vmul.f32 %v282, 0.5
    %v291 = vmul.f32 %v209, %v283
    %v292 = vmul.f32 %v211, %v284
    %v293 = vmul.f32 %v213, %v285
    %v294 = vmul.f32 %v215, %v286
    %v295 = vmul.f32 %v219, %v287
    %v296 = vmul.f32 %v221, %v288
    %v297 = vmul.f32 %v223, %v289
    %v298 = vmul.f32 %v225, %v290
    %v299 = vpack.c.bf16 %v293, %v291
    %v300 = vpack.c.bf16 %v294, %v292
    %v301 = vpack.c.bf16 %v297, %v295
    %v302 = vpack.c.bf16 %v298, %v296
    %v303 = vld [vmem:[#allocation5] sm:$0xf]
    %v304 = vld [vmem:[#allocation5 + $0x4] sm:$0xf]
    %v305 = vld [vmem:[#allocation5 + $0x8] sm:$0xf]
    %v306 = vld [vmem:[#allocation5 + $0xc] sm:$0xf]
    %v307 = vld [vmem:[#allocation5 + $0x10] sm:$0xf]
    %v308 = vld [vmem:[#allocation5 + $0x14] sm:$0xf]
    %v309 = vld [vmem:[#allocation5 + $0x18] sm:$0xf]
    %v310 = vld [vmem:[#allocation5 + $0x1c] sm:$0xf]
    %v311 = vld [vmem:[#allocation5 + $0x20] sm:$0xf]
    %v312 = vld [vmem:[#allocation5 + $0x24] sm:$0xf]
    %v313 = vld [vmem:[#allocation5 + $0x28] sm:$0xf]
    %v314 = vld [vmem:[#allocation5 + $0x2c] sm:$0xf]
    %v315 = vld [vmem:[#allocation5 + $0x30] sm:$0xf]
    %v316 = vld [vmem:[#allocation5 + $0x34] sm:$0xf]
    %v317 = vld [vmem:[#allocation5 + $0x38] sm:$0xf]
    %v318 = vld [vmem:[#allocation5 + $0x3c] sm:$0xf]
    %v319 = vld [vmem:[#allocation5 + $0x40] sm:$0xf]
    %v320 = vld [vmem:[#allocation5 + $0x44] sm:$0xf]
    %v321 = vld [vmem:[#allocation5 + $0x48] sm:$0xf]
    %v322 = vld [vmem:[#allocation5 + $0x4c] sm:$0xf]
    %v323 = vld [vmem:[#allocation5 + $0x50] sm:$0xf]
    %v324 = vld [vmem:[#allocation5 + $0x54] sm:$0xf]
    %v325 = vld [vmem:[#allocation5 + $0x58] sm:$0xf]
    %v326 = vld [vmem:[#allocation5 + $0x5c] sm:$0xf]
    %v327 = vld [vmem:[#allocation5 + $0x60] sm:$0xf]
    %v328 = vld [vmem:[#allocation5 + $0x64] sm:$0xf]
    %v329 = vld [vmem:[#allocation5 + $0x68] sm:$0xf]
    %v330 = vld [vmem:[#allocation5 + $0x6c] sm:$0xf]
    %v331 = vld [vmem:[#allocation5 + $0x70] sm:$0xf]
    %v332 = vld [vmem:[#allocation5 + $0x74] sm:$0xf]
    %v333 = vld [vmem:[#allocation5 + $0x78] sm:$0xf]
    %v334 = vld [vmem:[#allocation5 + $0x7c] sm:$0xf]
    %v335 = vld [vmem:[%s4] sm:$0x1]
    %v337 = vlaneseq
    %v338 = vshrl.u32 %v337, 7
    %v339 = vsub.s32 0, %v338
    %v340 = vrot.slane %v335, %v339
    %v374 = vunpack.c.l.b16 %v303
    %v375 = vunpack.c.l.b16 %v304
    %v376 = vunpack.c.l.b16 %v305
    %v377 = vunpack.c.l.b16 %v306
    %v378 = vunpack.c.l.b16 %v307
    %v379 = vunpack.c.l.b16 %v308
    %v380 = vunpack.c.l.b16 %v309
    %v381 = vunpack.c.l.b16 %v310
    %v382 = vunpack.c.l.b16 %v311
    %v383 = vunpack.c.l.b16 %v312
    %v384 = vunpack.c.l.b16 %v313
    %v385 = vunpack.c.l.b16 %v314
    %v386 = vunpack.c.l.b16 %v315
    %v387 = vunpack.c.l.b16 %v316
    %v388 = vunpack.c.l.b16 %v317
    %v389 = vunpack.c.l.b16 %v318
    %v390 = vunpack.c.l.b16 %v319
    %v391 = vunpack.c.l.b16 %v320
    %v392 = vunpack.c.l.b16 %v321
    %v393 = vunpack.c.l.b16 %v322
    %v394 = vunpack.c.l.b16 %v323
    %v395 = vunpack.c.l.b16 %v324
    %v396 = vunpack.c.l.b16 %v325
    %v397 = vunpack.c.l.b16 %v326
    %v398 = vunpack.c.l.b16 %v327
    %v399 = vunpack.c.l.b16 %v328
    %v400 = vunpack.c.l.b16 %v329
    %v401 = vunpack.c.l.b16 %v330
    %v402 = vunpack.c.l.b16 %v331
    %v403 = vunpack.c.l.b16 %v332
    %v404 = vunpack.c.l.b16 %v333
    %v405 = vunpack.c.l.b16 %v334
    %v406 = vpack.c.b16 %v375, %v374
    %v407 = vpack.c.b16 %v377, %v376
    %v408 = vpack.c.b16 %v379, %v378
    %v409 = vpack.c.b16 %v381, %v380
    %v410 = vpack.c.b16 %v383, %v382
    %v411 = vpack.c.b16 %v385, %v384
    %v412 = vpack.c.b16 %v387, %v386
    %v413 = vpack.c.b16 %v389, %v388
    %v414 = vpack.c.b16 %v391, %v390
    %v415 = vpack.c.b16 %v393, %v392
    %v416 = vpack.c.b16 %v395, %v394
    %v417 = vpack.c.b16 %v397, %v396
    %v418 = vpack.c.b16 %v399, %v398
    %v419 = vpack.c.b16 %v401, %v400
    %v420 = vpack.c.b16 %v403, %v402
    %v421 = vpack.c.b16 %v405, %v404
    %438 = vmatprep.subr.bf16.mxu0 0
    %439 = vmatpush1.bf16.msra.mxu0 %v406
    %440 = vmatprep.subr.bf16.mxu0 0
    %441 = vmatpush1.bf16.msra.mxu0 %v407
    %442 = vmatprep.subr.bf16.mxu0 0
    %443 = vmatpush1.bf16.msra.mxu0 %v408
    %444 = vmatprep.subr.bf16.mxu0 0
    %445 = vmatpush1.bf16.msra.mxu0 %v409
    %446 = vmatprep.subr.bf16.mxu0 0
    %447 = vmatpush1.bf16.msra.mxu0 %v410
    %448 = vmatprep.subr.bf16.mxu0 0
    %449 = vmatpush1.bf16.msra.mxu0 %v411
    %450 = vmatprep.subr.bf16.mxu0 0
    %451 = vmatpush1.bf16.msra.mxu0 %v412
    %452 = vmatprep.subr.bf16.mxu0 0
    %453 = vmatpush1.bf16.msra.mxu0 %v413
    %454 = vmatprep.subr.bf16.mxu0 0
    %455 = vmatpush1.bf16.msra.mxu0 %v414
    %456 = vmatprep.subr.bf16.mxu0 0
    %457 = vmatpush1.bf16.msra.mxu0 %v415
    %458 = vmatprep.subr.bf16.mxu0 0
    %459 = vmatpush1.bf16.msra.mxu0 %v416
    %460 = vmatprep.subr.bf16.mxu0 0
    %461 = vmatpush1.bf16.msra.mxu0 %v417
    %462 = vmatprep.subr.bf16.mxu0 0
    %463 = vmatpush1.bf16.msra.mxu0 %v418
    %464 = vmatprep.subr.bf16.mxu0 0
    %465 = vmatpush1.bf16.msra.mxu0 %v419
    %466 = vmatprep.subr.bf16.mxu0 0
    %467 = vmatpush1.bf16.msra.mxu0 %v420
    %468 = vmatprep.subr.bf16.mxu0 0
    %469 = vmatpush1.bf16.msra.mxu0 %v421
    %470 = vmatprep.mubr.bf16.mxu0 %v300
    %471 = vmatmul.mubr.bf16.gmra.mrb[0].mxu0 %v299
    %v472 = vpop.f32.mrb[0].mxu0
    %v473 = vadd.f32 %v340, %v472
    %v474 = vpop.f32.mrb[0].mxu0
    %v475 = vpop.f32.mrb[0].mxu0
    %v476 = vadd.f32 %v340, %v475
    %v477 = vpop.f32.mrb[0].mxu0
    %478 = vmatprep.mubr.bf16.mxu0 %v302
    %479 = vmatmul.mubr.bf16.gmra.mrb[0].mxu0 %v301
    %v480 = vpop.f32.mrb[0].mxu0
    %v481 = vadd.f32 %v340, %v480
    %v482 = vpop.f32.mrb[0].mxu0
    %v483 = vpop.f32.mrb[0].mxu0
    %v484 = vadd.f32 %v340, %v483
    %v485 = vpop.f32.mrb[0].mxu0
    %486 = vdwg.mxu0
    %v487 = vpack.c.bf16 %v476, %v473
    %v488 = vpack.c.bf16 %v484, %v481
    %v491 = vunpack.c.l.b16 %v487
    %v492 = vunpack.c.h.b16 %v487
    %v493 = vunpack.c.l.b16 %v488
    %v494 = vunpack.c.h.b16 %v488
    %v495 = vpack.c.b16 %v491, %v491
    %v496 = vpack.c.b16 %v492, %v492
    %v497 = vpack.c.b16 %v493, %v493
    %v498 = vpack.c.b16 %v494, %v494
    %503 = vst [vmem:[#allocation7] sm:$0xf] %v495
    %504 = vst [vmem:[#allocation7 + $0x4] sm:$0xf] %v496
    %505 = vst [vmem:[#allocation7 + $0x8] sm:$0xf] %v497
    %506 = vst [vmem:[#allocation7 + $0xc] sm:$0xf] %v498
    // Predicated region
    $region30: #{fused_mlp.1} parent=1 // pred_check
      _
    $region31: #{fused_mlp.1} parent=1 // pred_check_branch
      %508 = sbr.rel (0) target = $region33
    $region32: #{fused_mlp.1} parent=1 // pred_region
      %s510 = ssub.s32 256, 256
      %511 = vsyncadd [#allocation4], %s510
      %s512 = sshll.u32 [#allocation7], 4
      %s513 = int_to_ptr.vmem [resolvable:$true] %s512
      %518 = dma.vmem_to_hbm [thread:$0]  %s513, 256, %s5, [#allocation4], 64, 64, 4
    $region33: #{fused_mlp.1} parent=1 // pred_fallthru
      _
    // Predicated region
    $region34: #{fused_mlp.1} parent=1 // pred_check
      _
    $region35: #{fused_mlp.1} parent=1 // pred_check_branch
      %520 = sbr.rel (0) target = $region37
    $region36: #{fused_mlp.1} parent=1 // pred_region
      %521 = dma.done [#allocation4], 256
    $region37: #{fused_mlp.1} parent=1 // pred_fallthru
      _
    %522 = vsyncpa [#allocation3], 1
    %523 = vsyncpa [#allocation6], 1
    %524 = vsyncpa [#allocation4], 1

</llo_original>
